<compile_context>
chip_gen: v5e
topology: v5e:2x2
jax: 0.10.0
libtpu: 0.0.40
codegen_flags: <defaults>
</compile_context>

<pallas_src>
import functools

import jax
import jax.numpy as jnp
from jax import lax
from jax.experimental import pallas as pl
from jax.experimental.pallas import tpu as pltpu

_VMEM_LIMIT_BYTES = 40 << 20  # safe on v5e/v6e (128 MiB) and v7x (64 MiB) physical VMEM


def _pick_block_rows(rows, cols, *, max_tile_bytes=6 << 20):
    """Largest row tile whose f32-equivalent footprint stays <= max_tile_bytes
    (bounds both the DMA buffers and the in-kernel f32 temporaries), rounded to
    a multiple of 8 rows unless it covers the whole array."""
    bytes_per_row = max(cols, 1) * 4           # budget in f32-equivalent bytes
    tb = max(1, max_tile_bytes // bytes_per_row)
    tb = max(8, (tb // 8) * 8)
    if tb >= rows:
        return rows
    return tb


def _grid_dims(rows, block_rows, num_splits):
    n_tiles = -(-rows // block_rows)
    splits = num_splits if (num_splits > 1 and n_tiles >= 2) else 1
    steps = -(-n_tiles // splits)
    return splits, steps, n_tiles


# --------------------------------------------------------------------------- #
# Kernels: each accumulates a per-split row-sum into a (1,1,1) output block.   #
# --------------------------------------------------------------------------- #
def _id_ce_sum_kernel(logits_ref, labels_ref, out_ref, *,
                      total_rows, block_rows, steps_per_split):
    p = pl.program_id(0)                 # parallel split (TensorCore)
    s = pl.program_id(1)                 # reduction step within the split
    tile = p * steps_per_split + s       # global row-tile index (may overhang)

    logits = logits_ref[...].astype(jnp.float32)   # (TB, C): cast per tile (VPU, ~free)
    labels = labels_ref[...]                       # (TB, 1) i32
    tb, c = logits.shape

    # numerically stable log-sum-exp per row
    m = jnp.max(logits, axis=-1, keepdims=True)
    lse = jnp.log(jnp.sum(jnp.exp(logits - m), axis=-1, keepdims=True)) + m

    # gather the label logit with a select (no one-hot cast / multiply)
    col = lax.broadcasted_iota(jnp.int32, (tb, c), 1)
    picked = jnp.sum(jnp.where(col == labels, logits, 0.0),
                     axis=-1, keepdims=True)

    ce = lse - picked                    # (TB, 1)

    # mask padded rows of partial tiles / overhanging (clamped) tiles (select, not multiply)
    row = tile * block_rows + lax.broadcasted_iota(jnp.int32, (tb, 1), 0)
    ce = jnp.where(row < total_rows, ce, 0.0)

    @pl.when(s == 0)
    def _():
        out_ref[...] = jnp.zeros_like(out_ref)

    out_ref[...] += jnp.sum(ce, axis=0, keepdims=True).reshape(1, 1, 1)


def _oe_sum_kernel(oe_ref, out_ref, *, total_rows, block_rows, steps_per_split):
    p = pl.program_id(0)
    s = pl.program_id(1)
    tile = p * steps_per_split + s

    oe = oe_ref[...].astype(jnp.float32)           # (TB, C)
    tb, c = oe.shape

    m = jnp.max(oe, axis=-1, keepdims=True)
    lse = jnp.log(jnp.sum(jnp.exp(oe - m), axis=-1, keepdims=True)) + m
    mean = jnp.sum(oe, axis=-1, keepdims=True) * (1.0 / c)
    per_row = lse - mean                 # (TB, 1)

    row = tile * block_rows + lax.broadcasted_iota(jnp.int32, (tb, 1), 0)
    per_row = jnp.where(row < total_rows, per_row, 0.0)

    @pl.when(s == 0)
    def _():
        out_ref[...] = jnp.zeros_like(out_ref)

    out_ref[...] += jnp.sum(per_row, axis=0, keepdims=True).reshape(1, 1, 1)


# --------------------------------------------------------------------------- #
# pallas_call wrappers                                                         #
# --------------------------------------------------------------------------- #
def _id_ce_sum(logits, labels_2d, *, block_rows=None, num_splits=1):
    rows, cols = logits.shape
    tb = block_rows if block_rows is not None else _pick_block_rows(rows, cols)
    splits, steps, n_tiles = _grid_dims(rows, tb, num_splits)

    def row_map(p, s):  # clamp overhanging tiles; kernel masks their rows to 0
        return (jnp.minimum(p * steps + s, n_tiles - 1), 0)

    kernel = functools.partial(_id_ce_sum_kernel, total_rows=rows,
                               block_rows=tb, steps_per_split=steps)
    itemsize = jnp.dtype(logits.dtype).itemsize
    partial_sums = pl.pallas_call(
        kernel,
        out_shape=jax.ShapeDtypeStruct((splits, 1, 1), jnp.float32),
        grid=(splits, steps),
        in_specs=[
            pl.BlockSpec((tb, cols), row_map),   # logits tile (native dtype)
            pl.BlockSpec((tb, 1), row_map),      # labels tile
        ],
        out_specs=pl.BlockSpec((1, 1, 1), lambda p, s: (p, 0, 0)),
        compiler_params=pltpu.CompilerParams(
            dimension_semantics=("parallel", "arbitrary"),
            vmem_limit_bytes=_VMEM_LIMIT_BYTES),
        cost_estimate=pl.CostEstimate(
            flops=6 * rows * cols,
            transcendentals=rows * cols + rows,
            bytes_accessed=rows * cols * itemsize + rows * 4 + splits * 4),
    )(logits, labels_2d)
    return jnp.sum(partial_sums)


def _oe_sum(oe_logits, *, block_rows=None, num_splits=1):
    rows, cols = oe_logits.shape
    tb = block_rows if block_rows is not None else _pick_block_rows(rows, cols)
    splits, steps, n_tiles = _grid_dims(rows, tb, num_splits)

    def row_map(p, s):
        return (jnp.minimum(p * steps + s, n_tiles - 1), 0)

    kernel = functools.partial(_oe_sum_kernel, total_rows=rows,
                               block_rows=tb, steps_per_split=steps)
    itemsize = jnp.dtype(oe_logits.dtype).itemsize
    partial_sums = pl.pallas_call(
        kernel,
        out_shape=jax.ShapeDtypeStruct((splits, 1, 1), jnp.float32),
        grid=(splits, steps),
        in_specs=[pl.BlockSpec((tb, cols), row_map)],
        out_specs=pl.BlockSpec((1, 1, 1), lambda p, s: (p, 0, 0)),
        compiler_params=pltpu.CompilerParams(
            dimension_semantics=("parallel", "arbitrary"),
            vmem_limit_bytes=_VMEM_LIMIT_BYTES),
        cost_estimate=pl.CostEstimate(
            flops=5 * rows * cols,
            transcendentals=rows * cols + rows,
            bytes_accessed=rows * cols * itemsize + splits * 4),
    )(oe_logits)
    return jnp.sum(partial_sums)


def outlier_exposure_loss(id_outputs, id_labels, oe_outputs, lamda=0.5, *,
                          block_rows=None, num_splits=1):
    """id_outputs: (B,C) logits, id_labels: (B,) int class ids, oe_outputs: (Boe,C).

    Inputs are streamed in their native dtype (bf16/f32); f32 cast happens
    per-tile inside the kernels."""
    id_outputs = jnp.asarray(id_outputs)
    oe_outputs = jnp.asarray(oe_outputs)
    labels_2d = jnp.asarray(id_labels, jnp.int32).reshape(-1, 1)

    B, _ = id_outputs.shape
    Boe, _ = oe_outputs.shape

    id_sum = _id_ce_sum(id_outputs, labels_2d,
                        block_rows=block_rows, num_splits=num_splits)
    oe_sum = _oe_sum(oe_outputs, block_rows=block_rows, num_splits=num_splits)

    id_loss = id_sum / jnp.float32(B)
    oe_loss = oe_sum / jnp.float32(Boe)
    return id_loss + jnp.float32(lamda) * oe_loss


# --------------------------------------------------------------------------- #
# Reference + self-test                                                        #
# --------------------------------------------------------------------------- #
def _reference(id_outputs, id_labels, oe_outputs, lamda=0.5):
    id_outputs = jnp.asarray(id_outputs, jnp.float32)
    oe_outputs = jnp.asarray(oe_outputs, jnp.float32)
    logp = jax.nn.log_softmax(id_outputs, axis=-1)
    id_loss = -jnp.mean(jnp.take_along_axis(logp, id_labels[:, None], axis=1))
    oe_loss = jnp.mean(-jnp.mean(oe_outputs, axis=1)
                       + jax.nn.logsumexp(oe_outputs, axis=1))
    return id_loss + lamda * oe_loss


if __name__ == "__main__":
    key = jax.random.PRNGKey(0)
    k1, k2, k3 = jax.random.split(key, 3)

    B, C, B_OE = 20, 10, 12
    id_outputs = jax.random.normal(k1, (B, C), dtype=jnp.float32)
    id_labels = jax.random.randint(k2, (B,), 0, C, dtype=jnp.int32)
    oe_outputs = jax.random.normal(k3, (B_OE, C), dtype=jnp.float32)

    # 1) Small block_rows + num_splits=2 forces a multi-tile grid (partial last
    #    tile, overhanging clamped tile on the split axis) -> tiled path.
    loss_tiled = outlier_exposure_loss(id_outputs, id_labels, oe_outputs,
                                       lamda=0.5, block_rows=8, num_splits=2)
    jax.block_until_ready(loss_tiled)

    # 2) Auto-sized (single-block, splits=1) path.
    loss_auto = outlier_exposure_loss(id_outputs, id_labels, oe_outputs, lamda=0.5)
    jax.block_until_ready(loss_auto)

    # 3) bf16 inputs streamed natively, cast to f32 inside the kernel.
    id_bf16 = id_outputs.astype(jnp.bfloat16)
    oe_bf16 = oe_outputs.astype(jnp.bfloat16)
    loss_bf16 = outlier_exposure_loss(id_bf16, id_labels, oe_bf16, lamda=0.5)
    jax.block_until_ready(loss_bf16)

    ref = _reference(id_outputs, id_labels, oe_outputs, lamda=0.5)
    ref_bf16 = _reference(id_bf16, id_labels, oe_bf16, lamda=0.5)

    assert jnp.allclose(loss_tiled, ref, atol=1e-5, rtol=1e-5), (loss_tiled, ref)
    assert jnp.allclose(loss_auto, ref, atol=1e-5, rtol=1e-5), (loss_auto, ref)
    assert jnp.allclose(loss_bf16, ref_bf16, atol=1e-4, rtol=1e-4), (loss_bf16, ref_bf16)

    print("KERNEL_OK")
</pallas_src>

<mosaic_0001>
module attributes {stable_mosaic.version = 11 : i64} {
  func.func @_id_ce_sum_kernel(%arg0: i32, %arg1: i32, %arg2: memref<8x10xf32, #tpu.memory_space<vmem>>, %arg3: memref<8x1xi32, #tpu.memory_space<vmem>>, %arg4: memref<1x1x1xf32, #tpu.memory_space<vmem>>) attributes {dimension_semantics = [#tpu.dimension_semantics<parallel>, #tpu.dimension_semantics<arbitrary>], iteration_bounds = array<i64: 2, 2>, scalar_prefetch = 0 : i64, scratch_operands = 0 : i64, tpu.core_type = #tpu.core_type<tc>, window_params = [{transform_indices = @transform_0, window_bounds = array<i64: 8, 10>}, {transform_indices = @transform_1, window_bounds = array<i64: 8, 1>}, {transform_indices = @transform_2, window_bounds = array<i64: 1, 1, 1>}]} {
    %c2_i32 = arith.constant 2 : i32
    %0 = arith.muli %arg0, %c2_i32 : i32
    %1 = arith.addi %0, %arg1 : i32
    %c0 = arith.constant 0 : index
    %c0_0 = arith.constant 0 : index
    %2 = vector.load %arg2[%c0, %c0_0] : memref<8x10xf32, #tpu.memory_space<vmem>>, vector<8x10xf32>
    %c0_1 = arith.constant 0 : index
    %c0_2 = arith.constant 0 : index
    %3 = vector.load %arg3[%c0_1, %c0_2] : memref<8x1xi32, #tpu.memory_space<vmem>>, vector<8x1xi32>
    %cst = arith.constant dense<0xFF800000> : vector<8xf32>
    %4 = vector.multi_reduction <maximumf>, %2, %cst [1] : vector<8x10xf32> to vector<8xf32>
    %5 = vector.shape_cast %4 : vector<8xf32> to vector<8x1xf32>
    %6 = vector.broadcast %5 : vector<8x1xf32> to vector<8x10xf32>
    %7 = arith.subf %2, %6 : vector<8x10xf32>
    %8 = math.exp %7 : vector<8x10xf32>
    %cst_3 = arith.constant dense<0.000000e+00> : vector<8xf32>
    %9 = vector.multi_reduction <add>, %8, %cst_3 [1] : vector<8x10xf32> to vector<8xf32>
    %10 = vector.shape_cast %9 : vector<8xf32> to vector<8x1xf32>
    %11 = math.log %10 : vector<8x1xf32>
    %12 = arith.addf %11, %5 : vector<8x1xf32>
    %13 = tpu.iota {dimensions = array<i32: 1>} : vector<8x10xi32>
    %14 = vector.broadcast %3 : vector<8x1xi32> to vector<8x10xi32>
    %15 = arith.cmpi eq, %13, %14 : vector<8x10xi32>
    %cst_4 = arith.constant 0.000000e+00 : f32
    %16 = vector.broadcast %cst_4 : f32 to vector<8x10xf32>
    %17 = arith.select %15, %2, %16 : vector<8x10xi1>, vector<8x10xf32>
    %cst_5 = arith.constant dense<0.000000e+00> : vector<8xf32>
    %18 = vector.multi_reduction <add>, %17, %cst_5 [1] : vector<8x10xf32> to vector<8xf32>
    %19 = vector.shape_cast %18 : vector<8xf32> to vector<8x1xf32>
    %20 = arith.subf %12, %19 : vector<8x1xf32>
    %c8_i32 = arith.constant 8 : i32
    %21 = arith.muli %1, %c8_i32 : i32
    %22 = tpu.iota {dimensions = array<i32: 0>} : vector<8x1xi32>
    %23 = vector.broadcast %21 : i32 to vector<8x1xi32>
    %24 = arith.addi %23, %22 : vector<8x1xi32>
    %c20_i32 = arith.constant 20 : i32
    %25 = vector.broadcast %c20_i32 : i32 to vector<8x1xi32>
    %26 = arith.cmpi slt, %24, %25 : vector<8x1xi32>
    %cst_6 = arith.constant 0.000000e+00 : f32
    %27 = vector.broadcast %cst_6 : f32 to vector<8x1xf32>
    %28 = arith.select %26, %20, %27 : vector<8x1xi1>, vector<8x1xf32>
    %c0_i32 = arith.constant 0 : i32
    %29 = arith.cmpi eq, %arg1, %c0_i32 : i32
    %30 = arith.extui %29 : i1 to i32
    %c0_i32_7 = arith.constant 0 : i32
    %31 = arith.cmpi ne, %30, %c0_i32_7 : i32
    scf.if %31 {
      %cst_15 = arith.constant 0.000000e+00 : f32
      %38 = vector.broadcast %cst_15 : f32 to vector<1x1x1xf32>
      %c0_16 = arith.constant 0 : index
      %c0_17 = arith.constant 0 : index
      %c0_18 = arith.constant 0 : index
      %39 = vector.load %arg4[%c0_16, %c0_17, %c0_18] : memref<1x1x1xf32, #tpu.memory_space<vmem>>, vector<1x1x1xf32>
      tpu.vector_store %arg4[%c0_16, %c0_17, %c0_18], %38 {strides = array<i32>} : memref<1x1x1xf32, #tpu.memory_space<vmem>>, vector<1x1x1xf32>,
    } else {
    }
    %c0_8 = arith.constant 0 : index
    %c0_9 = arith.constant 0 : index
    %c0_10 = arith.constant 0 : index
    %32 = vector.load %arg4[%c0_8, %c0_9, %c0_10] : memref<1x1x1xf32, #tpu.memory_space<vmem>>, vector<1x1x1xf32>
    %cst_11 = arith.constant dense<0.000000e+00> : vector<1xf32>
    %33 = vector.multi_reduction <add>, %28, %cst_11 [0] : vector<8x1xf32> to vector<1xf32>
    %34 = vector.shape_cast %33 : vector<1xf32> to vector<1x1xf32>
    %35 = vector.shape_cast %34 : vector<1x1xf32> to vector<1x1x1xf32>
    %36 = arith.addf %32, %35 : vector<1x1x1xf32>
    %c0_12 = arith.constant 0 : index
    %c0_13 = arith.constant 0 : index
    %c0_14 = arith.constant 0 : index
    %37 = vector.load %arg4[%c0_12, %c0_13, %c0_14] : memref<1x1x1xf32, #tpu.memory_space<vmem>>, vector<1x1x1xf32>
    tpu.vector_store %arg4[%c0_12, %c0_13, %c0_14], %36 {strides = array<i32>} : memref<1x1x1xf32, #tpu.memory_space<vmem>>, vector<1x1x1xf32>,
    return
  }
  func.func @transform_0(%arg0: i32, %arg1: i32) -> (i32, i32) {
    %c2_i32 = arith.constant 2 : i32
    %0 = arith.muli %arg0, %c2_i32 : i32
    %1 = arith.addi %0, %arg1 : i32
    %c2_i32_0 = arith.constant 2 : i32
    %2 = arith.minsi %1, %c2_i32_0 : i32
    %c0_i32 = arith.constant 0 : i32
    %c0_i32_1 = arith.constant 0 : i32
    return %2, %c0_i32 : i32, i32
  }
  func.func @transform_1(%arg0: i32, %arg1: i32) -> (i32, i32) {
    %c2_i32 = arith.constant 2 : i32
    %0 = arith.muli %arg0, %c2_i32 : i32
    %1 = arith.addi %0, %arg1 : i32
    %c2_i32_0 = arith.constant 2 : i32
    %2 = arith.minsi %1, %c2_i32_0 : i32
    %c0_i32 = arith.constant 0 : i32
    %c0_i32_1 = arith.constant 0 : i32
    return %2, %c0_i32 : i32, i32
  }
  func.func @transform_2(%arg0: i32, %arg1: i32) -> (i32, i32, i32) {
    %c0_i32 = arith.constant 0 : i32
    %c0_i32_0 = arith.constant 0 : i32
    %c0_i32_1 = arith.constant 0 : i32
    return %arg0, %c0_i32, %c0_i32_0 : i32, i32, i32
  }
}

</mosaic_0001>

<llo_original>
// kernel: tpu_custom_call.1
$region0: #{tpu_custom_call.1}
  #allocation0 [shape = 'u32[]', space=smem, size = 0x4, offset = 0x4, fixed_abs, tag = 'smem constant byte address 0x4 - core index']
  #allocation1 [shape = 'u32[72,128]{1,0:T(1,128)}', space=vmem, size = 0x9000, scoped, tag = 'internal scratch']
  %s0 = inlined_call_operand.vmem [shape: f32[20,10], index: 0, kind: input, shape index: {}]
  %s1 = inlined_call_operand.vmem [shape: s32[20,1], index: 1, kind: input, shape index: {}]
  %s2 = inlined_call_operand.vmem [shape: f32[2,1,1], index: 2, kind: output, shape index: {}]
  %s3 = sld [smem:[#allocation0]]
  $region45: #{tpu_custom_call.1} parent=0
    _
  %s5 = ssub.s32 1, %s3
  %s6 = scalar_select 0, %s5, %s3
  loop: start=0, step=1, limit=6
  $region2: #{tpu_custom_call.1} parent=0 // loop_pre_header
    _
  $region3: #{tpu_custom_call.1} parent=0 // loop_header
    %s8 = sphi 0, %s12
    %p9 = scmp.ge.s32.totalorder %s8, 6
    %s15 = sphi 0, %s27
    %s16 = sphi 0, %s23
    %s17 = sphi 0, %s15
    %s18 = sphi 0, %s16
    %s19 = sphi 0, %s17
    %s20 = sphi 0, %s18
    %s38 = sphi 0, %s40
    %s41 = sphi 0, %s38
    %s42 = sphi 0, %s41
    %s58 = sphi 0, %s42
    %s72 = sphi 0, %s74
    %s75 = sphi 0, %s72
    %s76 = sphi 0, %s75
    %s92 = sphi 0, %s76
    %s98 = sphi 0, %s100
    %s101 = sphi 0, %s98
    %s102 = sphi 0, %s101
    %s118 = sphi 0, %s102
  $region4: #{tpu_custom_call.1} parent=0 // loop_header_branch
    %11 = sbr.rel (%p9) target = $region8
  $region5: #{tpu_custom_call.1} parent=0 // loop_body
    %s13 = ssub.s32 %s8, 1
    %s14 = ssub.s32 %s8, 2
    %s21 = sadd.s32 1, %s16
    %p22 = scmp.ge.s32.totalorder %s21, 2
    %s23 = scalar_select %p22, 0, %s21
    %s24 = sadd.s32 1, %s15
    %s25 = scalar_select %p22, %s24, %s15
    %p26 = scmp.ge.s32.totalorder %s25, 2
    %s27 = scalar_select %p26, 0, %s25
    %s28 = smul.u32 %s15, 2
    %s29 = sadd.s32 %s28, %s16
    %p30 = scmp.lt.s32.totalorder %s29, 2
    %s31 = scalar_select %p30, %s29, 2
    %s32 = smul.u32 %s27, 2
    %s33 = sadd.s32 %s32, %s23
    %p34 = scmp.lt.s32.totalorder %s33, 2
    %s35 = scalar_select %p34, %s33, 2
    %s36 = ssub.s32 %s31, %s35
    %p37 = scmp.eq.s32.totalorder %s36, 0
    %s39 = sadd.s32 %s38, 1
    %s40 = scalar_select %p37, %s38, %s39
    %p43 = pneg %p37
    %p44 = scmp.eq.s32.totalorder %s8, 3
    %p45 = por %p43, %p44
    %p46 = scmp.ne.s32.totalorder %s38, %s41
    %p47 = scmp.eq.s32.totalorder %s8, 0
    %p48 = por %p46, %p47
    %p49 = scmp.ne.s32.totalorder %s38, %s41
    %p50 = scmp.eq.s32.totalorder %s13, 3
    %p51 = por %p49, %p50
    %p52 = scmp.ne.s32.totalorder %s41, %s42
    %p53 = scmp.eq.s32.totalorder %s13, 0
    %p54 = por %p52, %p53
    %p55 = scmp.ne.s32.totalorder %s41, %s42
    %p56 = scmp.eq.s32.totalorder %s14, 3
    %p57 = por %p55, %p56
    %p59 = scmp.ne.s32.totalorder %s42, %s58
    %p60 = scmp.eq.s32.totalorder %s14, 0
    %p61 = por %p59, %p60
    %s62 = smul.u32 %s15, 2
    %s63 = sadd.s32 %s62, %s16
    %p64 = scmp.lt.s32.totalorder %s63, 2
    %s65 = scalar_select %p64, %s63, 2
    %s66 = smul.u32 %s27, 2
    %s67 = sadd.s32 %s66, %s23
    %p68 = scmp.lt.s32.totalorder %s67, 2
    %s69 = scalar_select %p68, %s67, 2
    %s70 = ssub.s32 %s65, %s69
    %p71 = scmp.eq.s32.totalorder %s70, 0
    %s73 = sadd.s32 %s72, 1
    %s74 = scalar_select %p71, %s72, %s73
    %p77 = pneg %p71
    %p78 = scmp.eq.s32.totalorder %s8, 3
    %p79 = por %p77, %p78
    %p80 = scmp.ne.s32.totalorder %s72, %s75
    %p81 = scmp.eq.s32.totalorder %s8, 0
    %p82 = por %p80, %p81
    %p83 = scmp.ne.s32.totalorder %s72, %s75
    %p84 = scmp.eq.s32.totalorder %s13, 3
    %p85 = por %p83, %p84
    %p86 = scmp.ne.s32.totalorder %s75, %s76
    %p87 = scmp.eq.s32.totalorder %s13, 0
    %p88 = por %p86, %p87
    %p89 = scmp.ne.s32.totalorder %s75, %s76
    %p90 = scmp.eq.s32.totalorder %s14, 3
    %p91 = por %p89, %p90
    %p93 = scmp.ne.s32.totalorder %s76, %s92
    %p94 = scmp.eq.s32.totalorder %s14, 0
    %p95 = por %p93, %p94
    %s96 = ssub.s32 %s15, %s27
    %p97 = scmp.eq.s32.totalorder %s96, 0
    %s99 = sadd.s32 %s98, 1
    %s100 = scalar_select %p97, %s98, %s99
    %p103 = pneg %p97
    %p104 = scmp.eq.s32.totalorder %s8, 3
    %p105 = por %p103, %p104
    %p106 = scmp.ne.s32.totalorder %s98, %s101
    %p107 = scmp.eq.s32.totalorder %s8, 0
    %p108 = por %p106, %p107
    %p109 = scmp.ne.s32.totalorder %s98, %s101
    %p110 = scmp.eq.s32.totalorder %s13, 3
    %p111 = por %p109, %p110
    %p112 = scmp.ne.s32.totalorder %s101, %s102
    %p113 = scmp.eq.s32.totalorder %s13, 0
    %p114 = por %p112, %p113
    %p115 = scmp.ne.s32.totalorder %s101, %s102
    %p116 = scmp.eq.s32.totalorder %s14, 3
    %p117 = por %p115, %p116
    %p119 = scmp.ne.s32.totalorder %s102, %s118
    %p120 = scmp.eq.s32.totalorder %s14, 0
    %p121 = por %p119, %p120
    %p122 = scmp.le.s32.totalorder 1, %s8
    %p123 = scmp.lt.s32.totalorder %s8, 5
    %p124 = pnand %p122, %p123
    %p125 = pneg %p124
    // Predicated region
    $region9: #{tpu_custom_call.1} parent=5 // pred_check
      _
    $region10: #{tpu_custom_call.1} parent=5 // pred_check_branch
      %127 = sbr.rel (%p124) target = $region12
    $region11: #{tpu_custom_call.1} parent=5 // pred_region
      %s128 = ssub.s32 %s8, 1
    $region12: #{tpu_custom_call.1} parent=5 // pred_fallthru
      _
    %p129 = scmp.lt.s32.totalorder %s8, 4
    // Predicated region
    $region13: #{tpu_custom_call.1} parent=5 // pred_check
      %p130 = pneg %p129
    $region14: #{tpu_custom_call.1} parent=5 // pred_check_branch
      %132 = sbr.rel (%p130) target = $region16
    $region15: #{tpu_custom_call.1} parent=5 // pred_region
      // Predicated region
      $region17: #{tpu_custom_call.1} parent=15 // pred_check
        %p133 = pneg %p48
      $region18: #{tpu_custom_call.1} parent=15 // pred_check_branch
        %135 = sbr.rel (%p133) target = $region20
      $region19: #{tpu_custom_call.1} parent=15 // pred_region
        %s136 = smul.u32 %s15, 2
        %s137 = sadd.s32 %s136, %s16
        %p138 = scmp.lt.s32.totalorder %s137, 2
        %s139 = scalar_select %p138, %s137, 2
        %p140 = scmp.lt.s32.totalorder %s139, 2
        %s141 = scalar_select %p140, %s139, 2
        %s142 = smul.addr %s141, 8
        %s143 = scalar_lea.vmem %s0, %s142
        %s144 = smul.u32 %s15, 2
        %s145 = sadd.s32 %s144, %s16
        %p146 = scmp.lt.s32.totalorder %s145, 2
        %s147 = scalar_select %p146, %s145, 2
      $region20: #{tpu_custom_call.1} parent=15 // pred_fallthru
        _
      // Predicated region
      $region21: #{tpu_custom_call.1} parent=15 // pred_check
        %p148 = pneg %p82
      $region22: #{tpu_custom_call.1} parent=15 // pred_check_branch
        %150 = sbr.rel (%p148) target = $region24
      $region23: #{tpu_custom_call.1} parent=15 // pred_region
        %s151 = smul.u32 %s15, 2
        %s152 = sadd.s32 %s151, %s16
        %p153 = scmp.lt.s32.totalorder %s152, 2
        %s154 = scalar_select %p153, %s152, 2
        %p155 = scmp.lt.s32.totalorder %s154, 2
        %s156 = scalar_select %p155, %s154, 2
        %s157 = smul.addr %s156, 8
        %s158 = scalar_lea.vmem %s1, %s157
        %s159 = smul.u32 %s15, 2
        %s160 = sadd.s32 %s159, %s16
        %p161 = scmp.lt.s32.totalorder %s160, 2
        %s162 = scalar_select %p161, %s160, 2
      $region24: #{tpu_custom_call.1} parent=15 // pred_fallthru
        _
    $region16: #{tpu_custom_call.1} parent=5 // pred_fallthru
      _
    %p163 = scmp.le.s32.totalorder 1, %s8
    %p164 = scmp.lt.s32.totalorder %s8, 5
    %p165 = pnand %p163, %p164
    %p166 = pneg %p165
    // Predicated region
    $region25: #{tpu_custom_call.1} parent=5 // pred_check
      _
    $region26: #{tpu_custom_call.1} parent=5 // pred_check_branch
      %168 = sbr.rel (%p165) target = $region28
    $region27: #{tpu_custom_call.1} parent=5 // pred_region
      %s169 = ssub.s32 %s8, 1
      %s170 = smul.u32 %s17, 2
      %s171 = sadd.s32 %s170, %s18
      %p172 = scmp.lt.s32.totalorder %s171, 2
      %s173 = scalar_select %p172, %s171, 2
      %p174 = scmp.lt.s32.totalorder %s173, 2
      %s175 = scalar_select %p174, %s173, 2
      %s176 = smul.addr %s175, 8
      %s177 = scalar_lea.vmem %s0, %s176
      %p178 = pneg %p54
      %p179 = pneg %p51
      %s180 = smul.u32 %s17, 2
      %s181 = sadd.s32 %s180, %s18
      %p182 = scmp.lt.s32.totalorder %s181, 2
      %s183 = scalar_select %p182, %s181, 2
      %p184 = scmp.lt.s32.totalorder %s183, 2
      %s185 = scalar_select %p184, %s183, 2
      %s186 = smul.addr %s185, 8
      %s187 = scalar_lea.vmem %s1, %s186
      %p188 = pneg %p88
      %p189 = pneg %p85
      %p190 = pneg %p114
      %p191 = pneg %p111
      %p192 = scmp.lt.s32.totalorder %s17, 1
      %s193 = scalar_select %p192, %s17, 1
      %s194 = scalar_lea.vmem %s2, %s193
      %s195 = smul.u32 %s17, 2
      %s196 = sadd.s32 %s195, %s18
      %p197 = scmp.lt.s32.totalorder %s196, 2
      %s198 = scalar_select %p197, %s196, 2
      %p199 = scmp.lt.s32.totalorder %s198, 2
      %s200 = scalar_select %p199, %s198, 2
      %s201 = smul.addr %s200, 8
      %s202 = scalar_lea.vmem %s0, %s201
      %s203 = smul.u32 %s17, 2
      %s204 = sadd.s32 %s203, %s18
      %p205 = scmp.lt.s32.totalorder %s204, 2
      %s206 = scalar_select %p205, %s204, 2
      %s207 = smul.u32 %s17, 2
      %s208 = sadd.s32 %s207, %s18
      %p209 = scmp.lt.s32.totalorder %s208, 2
      %s210 = scalar_select %p209, %s208, 2
      %p211 = scmp.lt.s32.totalorder %s210, 2
      %s212 = scalar_select %p211, %s210, 2
      %s213 = smul.addr %s212, 8
      %s214 = scalar_lea.vmem %s1, %s213
      %s215 = smul.u32 %s17, 2
      %s216 = sadd.s32 %s215, %s18
      %p217 = scmp.lt.s32.totalorder %s216, 2
      %s218 = scalar_select %p217, %s216, 2
      %p219 = scmp.lt.s32.totalorder %s17, 1
      %s220 = scalar_select %p219, %s17, 1
      %s221 = scalar_lea.vmem %s2, %s220
      %s222 = smul.u32 %s17, 2
      %s223 = sadd.s32 %s222, %s18
      %v224 = vld [vmem:[%s202] sm:$0xff]
      %v225 = vld [vmem:[%s214] sm:$0xff]
      %vm226 = vcmask 80896
      %v227 = vsel %vm226, %v224, -inf
      %228 = vmax.xlane.f32.xlu0 %v227
      %v229 = vpop.xlane.xlu0 %228
      %v230 = vsub.f32 %v224, %v229
      %v231 = vmul.f32 %v230, 1.442695
      %v232 = vpow.pop %v231
      %v233 = vsel %vm226, %v232, 0.0
      %234 = vadd.xlane.f32.xlu0 %v233
      %v235 = vpop.xlane.xlu0 %234
      %v236 = vlog2.pop %v235
      %v237 = vmul.f32 %v236, 0.6931472
      %v238 = vadd.f32 %v237, %v229
      %v239 = vlaneseq
      %v240 = vand.u32 %v239, 127
      %241 = vset.pattern.permute.xlu0 0
      %242 = vperm.xlu0 %241, %v225
      %v243 = vpop.permute.xlu0 %242
      %vm244 = vcmp.eq.s32.totalorder %v240, %v243
      %v245 = vsel %vm244, %v224, 0.0
      %v246 = vsel %vm226, %v245, 0.0
      %247 = vadd.xlane.f32.xlu0 %v246
      %v248 = vpop.xlane.xlu0 %247
      %v249 = vsub.f32 %v238, %v248
      %s250 = smul.u32 %s223, 8
      %v251 = vlaneseq
      %v252 = vshrl.u32 %v251, 7
      %v253 = vstv %s250
      %v254 = vadd.s32 %v253, %v252
      %vm255 = vcmp.lt.s32.totalorder %v254, 20
      %v256 = vsel %vm255, %v249, 0.0
      %p257 = scmp.eq.s32.totalorder %s18, 0
      // Predicated region
      $region29: #{tpu_custom_call.1} parent=27 // pred_check
        %p258 = pneg %p257
      $region30: #{tpu_custom_call.1} parent=27 // pred_check_branch
        %260 = sbr.rel (%p258) target = $region32
      $region31: #{tpu_custom_call.1} parent=27 // pred_region
        %vm261 = vcmask 0
        %262 = vst.msk [vmem:[%s221] sm:$0x1] %vm261, 0.0
      $region32: #{tpu_custom_call.1} parent=27 // pred_fallthru
        _
      %v263 = vld [vmem:[%s221] sm:$0x1]
      %v264 = vrot.slane %v256, 4
      %v265 = vadd.f32 %v256, %v264
      %v266 = vrot.slane %v265, 2
      %v267 = vadd.f32 %v265, %v266
      %v268 = vrot.slane %v267, 1
      %v269 = vadd.f32 %v267, %v268
      %v270 = vadd.f32 %v263, %v269
      %vm271 = vcmask 0
      %272 = vst.msk [vmem:[%s221] sm:$0x1] %vm271, %v270
      %p273 = scmp.lt.s32.totalorder %s17, 1
      %s274 = scalar_select %p273, %s17, 1
      %s275 = scalar_lea.vmem %s2, %s274
      // Predicated region
      $region33: #{tpu_custom_call.1} parent=27 // pred_check
        %p276 = pneg %p111
      $region34: #{tpu_custom_call.1} parent=27 // pred_check_branch
        %278 = sbr.rel (%p276) target = $region36
      $region35: #{tpu_custom_call.1} parent=27 // pred_region
        _
      $region36: #{tpu_custom_call.1} parent=27 // pred_fallthru
        _
    $region28: #{tpu_custom_call.1} parent=5 // pred_fallthru
      _
    %p279 = scmp.le.s32.totalorder 2, %s8
    // Predicated region
    $region37: #{tpu_custom_call.1} parent=5 // pred_check
      %p280 = pneg %p279
    $region38: #{tpu_custom_call.1} parent=5 // pred_check_branch
      %282 = sbr.rel (%p280) target = $region40
    $region39: #{tpu_custom_call.1} parent=5 // pred_region
      %s283 = ssub.s32 %s8, 2
      // Predicated region
      $region41: #{tpu_custom_call.1} parent=39 // pred_check
        %p284 = pneg %p117
      $region42: #{tpu_custom_call.1} parent=39 // pred_check_branch
        %286 = sbr.rel (%p284) target = $region44
      $region43: #{tpu_custom_call.1} parent=39 // pred_region
        %p287 = scmp.lt.s32.totalorder %s19, 1
        %s288 = scalar_select %p287, %s19, 1
        %s289 = scalar_lea.vmem %s2, %s288
      $region44: #{tpu_custom_call.1} parent=39 // pred_fallthru
        _
    $region40: #{tpu_custom_call.1} parent=5 // pred_fallthru
      _
  $region6: #{tpu_custom_call.1} parent=0 // loop_footer
    %s12 = sadd.s32 1, %s8
  $region7: #{tpu_custom_call.1} parent=0 // loop_footer_branch
    %7 = sbr.rel target = $region3
  $region8: #{tpu_custom_call.1} parent=0 // loop_exit
    _

</llo_original>
